<compile_context>
chip_gen: v5e
topology: v5e:2x2
jax: 0.10.0
libtpu: 0.0.40
codegen_flags: <defaults>
</compile_context>

<pallas_src>
import jax
import jax.numpy as jnp
from jax.experimental import pallas as pl
from jax.experimental.pallas import tpu as pltpu

_VMEM_LIMIT = 48 * 1024 * 1024     # leave headroom under v7x's 64 MiB physical VMEM


def _round_up(x, m):
    return ((x + m - 1) // m) * m


def _vmem_spec():
    # Untiled, single-buffered VMEM residency for grid-invariant operands.
    return pl.BlockSpec(memory_space=pltpu.MemorySpace.VMEM)


# --------------------------------------------------------------------------
# Kernel 1: GRU question encoder (one B-tile per grid step, "parallel").
#   x_ref  : [T, tb, E] time-major token embeddings (bf16)
#   wi/wh  : fused input/hidden gate weights (order r|z|n, bf16)
#   bi/bh  : [1, 3H] f32
#   out    : [tb, H] last hidden state (f32)
# The input projection is computed per time step (no big [T*B,3H] temporary);
# the short static time loop is fully unrolled.
# --------------------------------------------------------------------------
def gru_kernel(x_ref, wi_ref, wh_ref, bi_ref, bh_ref, out_ref):
    T = x_ref.shape[0]
    tb, H = out_ref.shape
    wi = wi_ref[...]                                   # bf16 [E, 3H]
    wh = wh_ref[...]                                   # bf16 [H, 3H]
    bi = bi_ref[...]                                   # f32  [1, 3H]
    bh = bh_ref[...]                                   # f32  [1, 3H]

    h = jnp.zeros((tb, H), jnp.float32)
    for t in range(T):                                 # static unroll (T small)
        xp = jnp.dot(x_ref[t], wi, preferred_element_type=jnp.float32) + bi
        hp = jnp.dot(h.astype(jnp.bfloat16), wh,
                     preferred_element_type=jnp.float32) + bh
        r = jax.nn.sigmoid(xp[:, :H] + hp[:, :H])
        z = jax.nn.sigmoid(xp[:, H:2 * H] + hp[:, H:2 * H])
        n = jnp.tanh(xp[:, 2 * H:] + r * hp[:, 2 * H:])
        h = (1.0 - z) * n + z * h
    out_ref[...] = h


# --------------------------------------------------------------------------
# Kernel 2: attention + mask_softmax + fusion + classifier hidden.
# Grid = (B // tb,), "parallel".  v streams through VMEM in bf16 B-tiles.
# Outputs: att [tb, K] (lane-dense) and hcls [tb, 2*Hj] (bf16) for kernel 3.
# --------------------------------------------------------------------------
def attn_fuse_kernel(v_ref, q_ref, mask_ref,
                     attv_ref, attq_ref, attb1_ref, attw2_ref, attb2_ref,
                     qw_ref, qb_ref, vw_ref, vb_ref,
                     cw1_ref, cb1_ref,
                     att_ref, hcls_ref):
    v = v_ref[...]                                     # [tb, K, Dv] bf16
    q = q_ref[...].astype(jnp.bfloat16)                # [tb, H]
    mask = mask_ref[...]                               # [tb, K] f32
    tb, K, Dv = v.shape
    Hatt = attq_ref.shape[1]

    # v_att: concat(v, broadcast(q)) -> Linear -> ReLU, concat folded into two
    # matmuls against the split weight.
    v_part = jnp.dot(v.reshape(tb * K, Dv), attv_ref[...],
                     preferred_element_type=jnp.float32).reshape(tb, K, Hatt)
    q_part = jnp.dot(q, attq_ref[...], preferred_element_type=jnp.float32)
    h1 = jnp.maximum(v_part + q_part[:, None, :] + attb1_ref[...], 0.0)

    # N=1 output projection as VPU multiply + lane reduce (keeps [tb,K] layout,
    # avoids an N=1 MXU matmul and the (...,1)->(B,K) relayout).
    w2 = attw2_ref[...].reshape(1, 1, Hatt)            # bf16, promoted to f32
    att_logits = jnp.sum(h1 * w2, axis=-1) + attb2_ref[...]   # [tb, K]

    # mask_softmax (PyTorch reference: GLOBAL max, eps=1e-5).  Max is taken
    # over the B-tile; exact match to the reference when tb == B (demo), and
    # differs only through the eps term otherwise.
    x2 = jnp.exp(att_logits - jnp.max(att_logits))
    x3 = x2 * mask
    att = x3 / (jnp.sum(x3, axis=1, keepdims=True) + 1e-5)
    att_ref[...] = att                                 # [tb, K] lane-dense

    # attended visual feature: bf16 * f32-att multiply, f32 accumulate.
    v_emb = jnp.sum(att[:, :, None] * v, axis=1)       # [tb, Dv] f32

    # q_net / v_net (FCNet = Linear + ReLU), fusion, classifier hidden.
    q_repr = jnp.maximum(
        jnp.dot(q, qw_ref[...], preferred_element_type=jnp.float32)
        + qb_ref[...], 0.0)
    v_repr = jnp.maximum(
        jnp.dot(v_emb.astype(jnp.bfloat16), vw_ref[...],
                preferred_element_type=jnp.float32) + vb_ref[...], 0.0)
    joint = (q_repr * v_repr).astype(jnp.bfloat16)
    hcls = jnp.maximum(
        jnp.dot(joint, cw1_ref[...], preferred_element_type=jnp.float32)
        + cb1_ref[...], 0.0)
    hcls_ref[...] = hcls.astype(hcls_ref.dtype)


# --------------------------------------------------------------------------
# Kernel 3: classifier output matmul, tiled over (B, A_pad), both "parallel".
# --------------------------------------------------------------------------
def cls_out_kernel(h_ref, w_ref, b_ref, o_ref):
    o_ref[...] = (jnp.dot(h_ref[...], w_ref[...],
                          preferred_element_type=jnp.float32) + b_ref[...])


# --------------------------------------------------------------------------
# Wrapper (glue): embedding lookup + three pallas_calls + row softmax.
# --------------------------------------------------------------------------
def base_model_forward(params, v, q_tokens, v_mask, labels=None, bias=None,
                       *, b_tile=128, a_tile=512):
    B, T = q_tokens.shape
    _, K, Dv = v.shape
    H = params["gru_wh"].shape[0]
    Hj2 = params["cls_w1"].shape[1]
    A = params["cls_w2"].shape[1]

    tb = b_tile if (B % b_tile == 0) else B
    nb = B // tb

    # w_emb: embedding lookup (plain-JAX glue), time-major, bf16.
    w = params["emb_table"][q_tokens]                          # [B, T, E]
    x_tm = jnp.transpose(w, (1, 0, 2)).astype(jnp.bfloat16)    # [T, B, E]
    E = x_tm.shape[-1]

    # ---- q_emb (GRU), grid over B ("parallel" -> both v7x TCs used) ----
    q_emb = pl.pallas_call(
        gru_kernel,
        out_shape=jax.ShapeDtypeStruct((B, H), jnp.float32),
        grid=(nb,),
        in_specs=[
            pl.BlockSpec((T, tb, E), lambda i: (0, i, 0)),
            _vmem_spec(), _vmem_spec(), _vmem_spec(), _vmem_spec(),
        ],
        out_specs=pl.BlockSpec((tb, H), lambda i: (i, 0)),
        compiler_params=pltpu.CompilerParams(
            dimension_semantics=("parallel",),
            vmem_limit_bytes=_VMEM_LIMIT),
    )(x_tm, params["gru_wi"], params["gru_wh"],
      params["gru_bi"], params["gru_bh"])

    # ---- attention + fusion + classifier hidden, grid over B ----
    v_bf = v.astype(jnp.bfloat16)                      # cast once; halves v DMA

    att, hcls = pl.pallas_call(
        attn_fuse_kernel,
        out_shape=(jax.ShapeDtypeStruct((B, K), jnp.float32),
                   jax.ShapeDtypeStruct((B, Hj2), jnp.bfloat16)),
        grid=(nb,),
        in_specs=[
            pl.BlockSpec((tb, K, Dv), lambda i: (i, 0, 0)),
            pl.BlockSpec((tb, H), lambda i: (i, 0)),
            pl.BlockSpec((tb, K), lambda i: (i, 0)),
        ] + [_vmem_spec()] * 11,                       # grid-invariant weights
        out_specs=(pl.BlockSpec((tb, K), lambda i: (i, 0)),
                   pl.BlockSpec((tb, Hj2), lambda i: (i, 0))),
        compiler_params=pltpu.CompilerParams(
            dimension_semantics=("parallel",),
            vmem_limit_bytes=_VMEM_LIMIT),
    )(v_bf, q_emb, v_mask,
      params["att_wv"], params["att_wq"], params["att_b1"],
      params["att_w2"], params["att_b2"],
      params["qnet_w"], params["qnet_b"], params["vnet_w"], params["vnet_b"],
      params["cls_w1"], params["cls_b1"])

    # ---- classifier output matmul, tiled over (B, A_pad) ----
    ta = a_tile if A > a_tile else _round_up(A, 128)   # MXU-friendly tile
    A_pad = _round_up(A, ta)
    cw2, cb2 = params["cls_w2"], params["cls_b2"]
    if A_pad != A:
        cw2 = jnp.pad(cw2, ((0, 0), (0, A_pad - A)))
        cb2 = jnp.pad(cb2, ((0, 0), (0, A_pad - A)))
    na = A_pad // ta

    logits_pad = pl.pallas_call(
        cls_out_kernel,
        out_shape=jax.ShapeDtypeStruct((B, A_pad), jnp.float32),
        grid=(nb, na),
        in_specs=[
            pl.BlockSpec((tb, Hj2), lambda i, j: (i, 0)),
            pl.BlockSpec((Hj2, ta), lambda i, j: (0, j)),
            pl.BlockSpec((1, ta), lambda i, j: (0, j)),
        ],
        out_specs=pl.BlockSpec((tb, ta), lambda i, j: (i, j)),
        compiler_params=pltpu.CompilerParams(
            dimension_semantics=("parallel", "parallel"),
            vmem_limit_bytes=_VMEM_LIMIT),
    )(hcls, cw2, cb2)

    logits = logits_pad[:, :A]                         # drop A padding
    probs = jax.nn.softmax(logits, axis=1)             # F.softmax(logits, dim=1)
    att = att[:, :, None]                              # back to [B, K, 1]

    # Inference path (labels is None): the question-only head (c_1/c_2) feeds
    # only the loss, so it is skipped entirely.
    # TODO(synk): debias_loss_fn / BCE loss branches (labels is not None) not
    # implemented; loss is None as in the labels=None reference path.
    loss = None
    return probs, loss, att


def init_params(key, *, V, E, H, K, Dv, Hatt, Hj, A):
    del K
    ks = iter(jax.random.split(key, 32))

    def w(shape, scale=0.1):
        return (scale * jax.random.normal(next(ks), shape)).astype(jnp.bfloat16)

    def b(dim):
        return jnp.zeros((1, dim), jnp.float32)

    return dict(
        emb_table=(0.1 * jax.random.normal(next(ks), (V, E))).astype(jnp.float32),
        # GRU (PyTorch nn.GRU gate order r|z|n), fused + pre-transposed to [in, 3H]
        gru_wi=w((E, 3 * H)), gru_wh=w((H, 3 * H)),
        gru_bi=b(3 * H), gru_bh=b(3 * H),
        # v_att (concat weight split into visual/question halves);
        # the final 1-wide projection is stored as a row [1, Hatt] for the VPU reduce
        att_wv=w((Dv, Hatt)), att_wq=w((H, Hatt)), att_b1=b(Hatt),
        att_w2=w((1, Hatt)), att_b2=jnp.zeros((1, 1), jnp.float32),
        # q_net / v_net (FCNet = Linear + ReLU)
        qnet_w=w((H, Hj)), qnet_b=b(Hj),
        vnet_w=w((Dv, Hj)), vnet_b=b(Hj),
        # classifier: Hj -> 2*Hj -> A
        cls_w1=w((Hj, 2 * Hj)), cls_b1=b(2 * Hj),
        cls_w2=w((2 * Hj, A)), cls_b2=b(A),
        # question-only head (kept for a future loss path, unused at inference)
        c1_w=w((H, 2 * H)), c1_b=b(2 * H),
        c2_w=w((2 * H, A)), c2_b=b(A),
    )


if __name__ == "__main__":
    # Small shapes consistent with the forward:
    #   v: [batch, num_objs, obj_dim], q: [batch, seq_len] (int tokens)
    B, T, V, E, H = 2, 8, 50, 16, 32
    K, Dv, Hatt, Hj, A = 8, 32, 32, 32, 16

    root = jax.random.PRNGKey(0)
    k_par, k_q, k_v, k_m = jax.random.split(root, 4)

    params = init_params(k_par, V=V, E=E, H=H, K=K, Dv=Dv, Hatt=Hatt, Hj=Hj, A=A)

    q_tokens = jax.random.randint(k_q, (B, T), 0, V, dtype=jnp.int32)
    v = jax.random.normal(k_v, (B, K, Dv), dtype=jnp.float32)
    v_mask = (jax.random.uniform(k_m, (B, K)) > 0.2).astype(jnp.float32)

    logits, loss, att = base_model_forward(params, v, q_tokens, v_mask,
                                           labels=None, bias=None)
    jax.block_until_ready((logits, att))

    assert logits.shape == (B, A) and att.shape == (B, K, 1) and loss is None
    print("KERNEL_OK")
</pallas_src>

<mosaic_0001>
module attributes {stable_mosaic.version = 11 : i64} {
  func.func @gru_kernel(%arg0: i32, %arg1: memref<8x2x16xbf16, #tpu.memory_space<vmem>>, %arg2: memref<16x96xbf16, #tpu.memory_space<vmem>>, %arg3: memref<32x96xbf16, #tpu.memory_space<vmem>>, %arg4: memref<1x96xf32, #tpu.memory_space<vmem>>, %arg5: memref<1x96xf32, #tpu.memory_space<vmem>>, %arg6: memref<2x32xf32, #tpu.memory_space<vmem>>) attributes {dimension_semantics = [#tpu.dimension_semantics<parallel>], iteration_bounds = array<i64: 1>, scalar_prefetch = 0 : i64, scratch_operands = 0 : i64, tpu.core_type = #tpu.core_type<tc>, window_params = [{transform_indices = @transform_0, window_bounds = array<i64: 8, 2, 16>}, {pipeline_mode = #tpu.pipeline_mode<synchronous>, transform_indices = @transform_1, window_bounds = array<i64: 16, 96>}, {pipeline_mode = #tpu.pipeline_mode<synchronous>, transform_indices = @transform_2, window_bounds = array<i64: 32, 96>}, {pipeline_mode = #tpu.pipeline_mode<synchronous>, transform_indices = @transform_3, window_bounds = array<i64: 1, 96>}, {pipeline_mode = #tpu.pipeline_mode<synchronous>, transform_indices = @transform_4, window_bounds = array<i64: 1, 96>}, {transform_indices = @transform_5, window_bounds = array<i64: 2, 32>}]} {
    %c0 = arith.constant 0 : index
    %c0_0 = arith.constant 0 : index
    %0 = vector.load %arg2[%c0, %c0_0] : memref<16x96xbf16, #tpu.memory_space<vmem>>, vector<16x96xbf16>
    %c0_1 = arith.constant 0 : index
    %c0_2 = arith.constant 0 : index
    %1 = vector.load %arg3[%c0_1, %c0_2] : memref<32x96xbf16, #tpu.memory_space<vmem>>, vector<32x96xbf16>
    %c0_3 = arith.constant 0 : index
    %c0_4 = arith.constant 0 : index
    %2 = vector.load %arg4[%c0_3, %c0_4] : memref<1x96xf32, #tpu.memory_space<vmem>>, vector<1x96xf32>
    %c0_5 = arith.constant 0 : index
    %c0_6 = arith.constant 0 : index
    %3 = vector.load %arg5[%c0_5, %c0_6] : memref<1x96xf32, #tpu.memory_space<vmem>>, vector<1x96xf32>
    %cst = arith.constant 0.000000e+00 : f32
    %4 = vector.broadcast %cst : f32 to vector<2x32xf32>
    %c0_7 = arith.constant 0 : index
    %c0_8 = arith.constant 0 : index
    %c0_9 = arith.constant 0 : index
    %5 = vector.load %arg1[%c0_7, %c0_8, %c0_9] : memref<8x2x16xbf16, #tpu.memory_space<vmem>>, vector<1x2x16xbf16>
    %6 = vector.shape_cast %5 : vector<1x2x16xbf16> to vector<2x16xbf16>
    %cst_10 = arith.constant dense<0.000000e+00> : vector<2x96xf32>
    %7 = tpu.matmul %6, %0, %cst_10 {dimension_numbers = #tpu.dot_dimension_numbers<[1], [0], [0], [1], [0, 0, 1, 1], [], []>} : vector<2x16xbf16>, vector<16x96xbf16>, vector<2x96xf32> -> vector<2x96xf32>
    %8 = vector.broadcast %2 : vector<1x96xf32> to vector<2x96xf32>
    %9 = arith.addf %7, %8 : vector<2x96xf32>
    %10 = arith.truncf %4 : vector<2x32xf32> to vector<2x32xbf16>
    %cst_11 = arith.constant dense<0.000000e+00> : vector<2x96xf32>
    %11 = tpu.matmul %10, %1, %cst_11 {dimension_numbers = #tpu.dot_dimension_numbers<[1], [0], [0], [1], [0, 0, 1, 1], [], []>} : vector<2x32xbf16>, vector<32x96xbf16>, vector<2x96xf32> -> vector<2x96xf32>
    %12 = vector.broadcast %3 : vector<1x96xf32> to vector<2x96xf32>
    %13 = arith.addf %11, %12 : vector<2x96xf32>
    %14 = vector.extract_strided_slice %9 {offsets = [0, 0], sizes = [2, 32], strides = [1, 1]} : vector<2x96xf32> to vector<2x32xf32>
    %15 = vector.extract_strided_slice %13 {offsets = [0, 0], sizes = [2, 32], strides = [1, 1]} : vector<2x96xf32> to vector<2x32xf32>
    %16 = arith.addf %14, %15 : vector<2x32xf32>
    %17 = arith.negf %16 : vector<2x32xf32>
    %18 = math.exp %17 : vector<2x32xf32>
    %cst_12 = arith.constant 1.000000e+00 : f32
    %19 = vector.broadcast %cst_12 : f32 to vector<2x32xf32>
    %20 = arith.addf %19, %18 : vector<2x32xf32>
    %21 = arith.divf %19, %20 : vector<2x32xf32>
    %22 = vector.extract_strided_slice %9 {offsets = [0, 32], sizes = [2, 32], strides = [1, 1]} : vector<2x96xf32> to vector<2x32xf32>
    %23 = vector.extract_strided_slice %13 {offsets = [0, 32], sizes = [2, 32], strides = [1, 1]} : vector<2x96xf32> to vector<2x32xf32>
    %24 = arith.addf %22, %23 : vector<2x32xf32>
    %25 = arith.negf %24 : vector<2x32xf32>
    %26 = math.exp %25 : vector<2x32xf32>
    %cst_13 = arith.constant 1.000000e+00 : f32
    %27 = vector.broadcast %cst_13 : f32 to vector<2x32xf32>
    %28 = arith.addf %27, %26 : vector<2x32xf32>
    %29 = arith.divf %27, %28 : vector<2x32xf32>
    %30 = vector.extract_strided_slice %9 {offsets = [0, 64], sizes = [2, 32], strides = [1, 1]} : vector<2x96xf32> to vector<2x32xf32>
    %31 = vector.extract_strided_slice %13 {offsets = [0, 64], sizes = [2, 32], strides = [1, 1]} : vector<2x96xf32> to vector<2x32xf32>
    %32 = arith.mulf %21, %31 : vector<2x32xf32>
    %33 = arith.addf %30, %32 : vector<2x32xf32>
    %34 = math.tanh %33 : vector<2x32xf32>
    %cst_14 = arith.constant 1.000000e+00 : f32
    %35 = vector.broadcast %cst_14 : f32 to vector<2x32xf32>
    %36 = arith.subf %35, %29 : vector<2x32xf32>
    %37 = arith.mulf %36, %34 : vector<2x32xf32>
    %38 = arith.mulf %29, %4 : vector<2x32xf32>
    %39 = arith.addf %37, %38 : vector<2x32xf32>
    %c1 = arith.constant 1 : index
    %c0_15 = arith.constant 0 : index
    %c0_16 = arith.constant 0 : index
    %40 = vector.load %arg1[%c1, %c0_15, %c0_16] : memref<8x2x16xbf16, #tpu.memory_space<vmem>>, vector<1x2x16xbf16>
    %41 = vector.shape_cast %40 : vector<1x2x16xbf16> to vector<2x16xbf16>
    %cst_17 = arith.constant dense<0.000000e+00> : vector<2x96xf32>
    %42 = tpu.matmul %41, %0, %cst_17 {dimension_numbers = #tpu.dot_dimension_numbers<[1], [0], [0], [1], [0, 0, 1, 1], [], []>} : vector<2x16xbf16>, vector<16x96xbf16>, vector<2x96xf32> -> vector<2x96xf32>
    %43 = vector.broadcast %2 : vector<1x96xf32> to vector<2x96xf32>
    %44 = arith.addf %42, %43 : vector<2x96xf32>
    %45 = arith.truncf %39 : vector<2x32xf32> to vector<2x32xbf16>
    %cst_18 = arith.constant dense<0.000000e+00> : vector<2x96xf32>
    %46 = tpu.matmul %45, %1, %cst_18 {dimension_numbers = #tpu.dot_dimension_numbers<[1], [0], [0], [1], [0, 0, 1, 1], [], []>} : vector<2x32xbf16>, vector<32x96xbf16>, vector<2x96xf32> -> vector<2x96xf32>
    %47 = vector.broadcast %3 : vector<1x96xf32> to vector<2x96xf32>
    %48 = arith.addf %46, %47 : vector<2x96xf32>
    %49 = vector.extract_strided_slice %44 {offsets = [0, 0], sizes = [2, 32], strides = [1, 1]} : vector<2x96xf32> to vector<2x32xf32>
    %50 = vector.extract_strided_slice %48 {offsets = [0, 0], sizes = [2, 32], strides = [1, 1]} : vector<2x96xf32> to vector<2x32xf32>
    %51 = arith.addf %49, %50 : vector<2x32xf32>
    %52 = arith.negf %51 : vector<2x32xf32>
    %53 = math.exp %52 : vector<2x32xf32>
    %cst_19 = arith.constant 1.000000e+00 : f32
    %54 = vector.broadcast %cst_19 : f32 to vector<2x32xf32>
    %55 = arith.addf %54, %53 : vector<2x32xf32>
    %56 = arith.divf %54, %55 : vector<2x32xf32>
    %57 = vector.extract_strided_slice %44 {offsets = [0, 32], sizes = [2, 32], strides = [1, 1]} : vector<2x96xf32> to vector<2x32xf32>
    %58 = vector.extract_strided_slice %48 {offsets = [0, 32], sizes = [2, 32], strides = [1, 1]} : vector<2x96xf32> to vector<2x32xf32>
    %59 = arith.addf %57, %58 : vector<2x32xf32>
    %60 = arith.negf %59 : vector<2x32xf32>
    %61 = math.exp %60 : vector<2x32xf32>
    %cst_20 = arith.constant 1.000000e+00 : f32
    %62 = vector.broadcast %cst_20 : f32 to vector<2x32xf32>
    %63 = arith.addf %62, %61 : vector<2x32xf32>
    %64 = arith.divf %62, %63 : vector<2x32xf32>
    %65 = vector.extract_strided_slice %44 {offsets = [0, 64], sizes = [2, 32], strides = [1, 1]} : vector<2x96xf32> to vector<2x32xf32>
    %66 = vector.extract_strided_slice %48 {offsets = [0, 64], sizes = [2, 32], strides = [1, 1]} : vector<2x96xf32> to vector<2x32xf32>
    %67 = arith.mulf %56, %66 : vector<2x32xf32>
    %68 = arith.addf %65, %67 : vector<2x32xf32>
    %69 = math.tanh %68 : vector<2x32xf32>
    %cst_21 = arith.constant 1.000000e+00 : f32
    %70 = vector.broadcast %cst_21 : f32 to vector<2x32xf32>
    %71 = arith.subf %70, %64 : vector<2x32xf32>
    %72 = arith.mulf %71, %69 : vector<2x32xf32>
    %73 = arith.mulf %64, %39 : vector<2x32xf32>
    %74 = arith.addf %72, %73 : vector<2x32xf32>
    %c2 = arith.constant 2 : index
    %c0_22 = arith.constant 0 : index
    %c0_23 = arith.constant 0 : index
    %75 = vector.load %arg1[%c2, %c0_22, %c0_23] : memref<8x2x16xbf16, #tpu.memory_space<vmem>>, vector<1x2x16xbf16>
    %76 = vector.shape_cast %75 : vector<1x2x16xbf16> to vector<2x16xbf16>
    %cst_24 = arith.constant dense<0.000000e+00> : vector<2x96xf32>
    %77 = tpu.matmul %76, %0, %cst_24 {dimension_numbers = #tpu.dot_dimension_numbers<[1], [0], [0], [1], [0, 0, 1, 1], [], []>} : vector<2x16xbf16>, vector<16x96xbf16>, vector<2x96xf32> -> vector<2x96xf32>
    %78 = vector.broadcast %2 : vector<1x96xf32> to vector<2x96xf32>
    %79 = arith.addf %77, %78 : vector<2x96xf32>
    %80 = arith.truncf %74 : vector<2x32xf32> to vector<2x32xbf16>
    %cst_25 = arith.constant dense<0.000000e+00> : vector<2x96xf32>
    %81 = tpu.matmul %80, %1, %cst_25 {dimension_numbers = #tpu.dot_dimension_numbers<[1], [0], [0], [1], [0, 0, 1, 1], [], []>} : vector<2x32xbf16>, vector<32x96xbf16>, vector<2x96xf32> -> vector<2x96xf32>
    %82 = vector.broadcast %3 : vector<1x96xf32> to vector<2x96xf32>
    %83 = arith.addf %81, %82 : vector<2x96xf32>
    %84 = vector.extract_strided_slice %79 {offsets = [0, 0], sizes = [2, 32], strides = [1, 1]} : vector<2x96xf32> to vector<2x32xf32>
    %85 = vector.extract_strided_slice %83 {offsets = [0, 0], sizes = [2, 32], strides = [1, 1]} : vector<2x96xf32> to vector<2x32xf32>
    %86 = arith.addf %84, %85 : vector<2x32xf32>
    %87 = arith.negf %86 : vector<2x32xf32>
    %88 = math.exp %87 : vector<2x32xf32>
    %cst_26 = arith.constant 1.000000e+00 : f32
    %89 = vector.broadcast %cst_26 : f32 to vector<2x32xf32>
    %90 = arith.addf %89, %88 : vector<2x32xf32>
    %91 = arith.divf %89, %90 : vector<2x32xf32>
    %92 = vector.extract_strided_slice %79 {offsets = [0, 32], sizes = [2, 32], strides = [1, 1]} : vector<2x96xf32> to vector<2x32xf32>
    %93 = vector.extract_strided_slice %83 {offsets = [0, 32], sizes = [2, 32], strides = [1, 1]} : vector<2x96xf32> to vector<2x32xf32>
    %94 = arith.addf %92, %93 : vector<2x32xf32>
    %95 = arith.negf %94 : vector<2x32xf32>
    %96 = math.exp %95 : vector<2x32xf32>
    %cst_27 = arith.constant 1.000000e+00 : f32
    %97 = vector.broadcast %cst_27 : f32 to vector<2x32xf32>
    %98 = arith.addf %97, %96 : vector<2x32xf32>
    %99 = arith.divf %97, %98 : vector<2x32xf32>
    %100 = vector.extract_strided_slice %79 {offsets = [0, 64], sizes = [2, 32], strides = [1, 1]} : vector<2x96xf32> to vector<2x32xf32>
    %101 = vector.extract_strided_slice %83 {offsets = [0, 64], sizes = [2, 32], strides = [1, 1]} : vector<2x96xf32> to vector<2x32xf32>
    %102 = arith.mulf %91, %101 : vector<2x32xf32>
    %103 = arith.addf %100, %102 : vector<2x32xf32>
    %104 = math.tanh %103 : vector<2x32xf32>
    %cst_28 = arith.constant 1.000000e+00 : f32
    %105 = vector.broadcast %cst_28 : f32 to vector<2x32xf32>
    %106 = arith.subf %105, %99 : vector<2x32xf32>
    %107 = arith.mulf %106, %104 : vector<2x32xf32>
    %108 = arith.mulf %99, %74 : vector<2x32xf32>
    %109 = arith.addf %107, %108 : vector<2x32xf32>
    %c3 = arith.constant 3 : index
    %c0_29 = arith.constant 0 : index
    %c0_30 = arith.constant 0 : index
    %110 = vector.load %arg1[%c3, %c0_29, %c0_30] : memref<8x2x16xbf16, #tpu.memory_space<vmem>>, vector<1x2x16xbf16>
    %111 = vector.shape_cast %110 : vector<1x2x16xbf16> to vector<2x16xbf16>
    %cst_31 = arith.constant dense<0.000000e+00> : vector<2x96xf32>
    %112 = tpu.matmul %111, %0, %cst_31 {dimension_numbers = #tpu.dot_dimension_numbers<[1], [0], [0], [1], [0, 0, 1, 1], [], []>} : vector<2x16xbf16>, vector<16x96xbf16>, vector<2x96xf32> -> vector<2x96xf32>
    %113 = vector.broadcast %2 : vector<1x96xf32> to vector<2x96xf32>
    %114 = arith.addf %112, %113 : vector<2x96xf32>
    %115 = arith.truncf %109 : vector<2x32xf32> to vector<2x32xbf16>
    %cst_32 = arith.constant dense<0.000000e+00> : vector<2x96xf32>
    %116 = tpu.matmul %115, %1, %cst_32 {dimension_numbers = #tpu.dot_dimension_numbers<[1], [0], [0], [1], [0, 0, 1, 1], [], []>} : vector<2x32xbf16>, vector<32x96xbf16>, vector<2x96xf32> -> vector<2x96xf32>
    %117 = vector.broadcast %3 : vector<1x96xf32> to vector<2x96xf32>
    %118 = arith.addf %116, %117 : vector<2x96xf32>
    %119 = vector.extract_strided_slice %114 {offsets = [0, 0], sizes = [2, 32], strides = [1, 1]} : vector<2x96xf32> to vector<2x32xf32>
    %120 = vector.extract_strided_slice %118 {offsets = [0, 0], sizes = [2, 32], strides = [1, 1]} : vector<2x96xf32> to vector<2x32xf32>
    %121 = arith.addf %119, %120 : vector<2x32xf32>
    %122 = arith.negf %121 : vector<2x32xf32>
    %123 = math.exp %122 : vector<2x32xf32>
    %cst_33 = arith.constant 1.000000e+00 : f32
    %124 = vector.broadcast %cst_33 : f32 to vector<2x32xf32>
    %125 = arith.addf %124, %123 : vector<2x32xf32>
    %126 = arith.divf %124, %125 : vector<2x32xf32>
    %127 = vector.extract_strided_slice %114 {offsets = [0, 32], sizes = [2, 32], strides = [1, 1]} : vector<2x96xf32> to vector<2x32xf32>
    %128 = vector.extract_strided_slice %118 {offsets = [0, 32], sizes = [2, 32], strides = [1, 1]} : vector<2x96xf32> to vector<2x32xf32>
    %129 = arith.addf %127, %128 : vector<2x32xf32>
    %130 = arith.negf %129 : vector<2x32xf32>
    %131 = math.exp %130 : vector<2x32xf32>
    %cst_34 = arith.constant 1.000000e+00 : f32
    %132 = vector.broadcast %cst_34 : f32 to vector<2x32xf32>
    %133 = arith.addf %132, %131 : vector<2x32xf32>
    %134 = arith.divf %132, %133 : vector<2x32xf32>
    %135 = vector.extract_strided_slice %114 {offsets = [0, 64], sizes = [2, 32], strides = [1, 1]} : vector<2x96xf32> to vector<2x32xf32>
    %136 = vector.extract_strided_slice %118 {offsets = [0, 64], sizes = [2, 32], strides = [1, 1]} : vector<2x96xf32> to vector<2x32xf32>
    %137 = arith.mulf %126, %136 : vector<2x32xf32>
    %138 = arith.addf %135, %137 : vector<2x32xf32>
    %139 = math.tanh %138 : vector<2x32xf32>
    %cst_35 = arith.constant 1.000000e+00 : f32
    %140 = vector.broadcast %cst_35 : f32 to vector<2x32xf32>
    %141 = arith.subf %140, %134 : vector<2x32xf32>
    %142 = arith.mulf %141, %139 : vector<2x32xf32>
    %143 = arith.mulf %134, %109 : vector<2x32xf32>
    %144 = arith.addf %142, %143 : vector<2x32xf32>
    %c4 = arith.constant 4 : index
    %c0_36 = arith.constant 0 : index
    %c0_37 = arith.constant 0 : index
    %145 = vector.load %arg1[%c4, %c0_36, %c0_37] : memref<8x2x16xbf16, #tpu.memory_space<vmem>>, vector<1x2x16xbf16>
    %146 = vector.shape_cast %145 : vector<1x2x16xbf16> to vector<2x16xbf16>
    %cst_38 = arith.constant dense<0.000000e+00> : vector<2x96xf32>
    %147 = tpu.matmul %146, %0, %cst_38 {dimension_numbers = #tpu.dot_dimension_numbers<[1], [0], [0], [1], [0, 0, 1, 1], [], []>} : vector<2x16xbf16>, vector<16x96xbf16>, vector<2x96xf32> -> vector<2x96xf32>
    %148 = vector.broadcast %2 : vector<1x96xf32> to vector<2x96xf32>
    %149 = arith.addf %147, %148 : vector<2x96xf32>
    %150 = arith.truncf %144 : vector<2x32xf32> to vector<2x32xbf16>
    %cst_39 = arith.constant dense<0.000000e+00> : vector<2x96xf32>
    %151 = tpu.matmul %150, %1, %cst_39 {dimension_numbers = #tpu.dot_dimension_numbers<[1], [0], [0], [1], [0, 0, 1, 1], [], []>} : vector<2x32xbf16>, vector<32x96xbf16>, vector<2x96xf32> -> vector<2x96xf32>
    %152 = vector.broadcast %3 : vector<1x96xf32> to vector<2x96xf32>
    %153 = arith.addf %151, %152 : vector<2x96xf32>
    %154 = vector.extract_strided_slice %149 {offsets = [0, 0], sizes = [2, 32], strides = [1, 1]} : vector<2x96xf32> to vector<2x32xf32>
    %155 = vector.extract_strided_slice %153 {offsets = [0, 0], sizes = [2, 32], strides = [1, 1]} : vector<2x96xf32> to vector<2x32xf32>
    %156 = arith.addf %154, %155 : vector<2x32xf32>
    %157 = arith.negf %156 : vector<2x32xf32>
    %158 = math.exp %157 : vector<2x32xf32>
    %cst_40 = arith.constant 1.000000e+00 : f32
    %159 = vector.broadcast %cst_40 : f32 to vector<2x32xf32>
    %160 = arith.addf %159, %158 : vector<2x32xf32>
    %161 = arith.divf %159, %160 : vector<2x32xf32>
    %162 = vector.extract_strided_slice %149 {offsets = [0, 32], sizes = [2, 32], strides = [1, 1]} : vector<2x96xf32> to vector<2x32xf32>
    %163 = vector.extract_strided_slice %153 {offsets = [0, 32], sizes = [2, 32], strides = [1, 1]} : vector<2x96xf32> to vector<2x32xf32>
    %164 = arith.addf %162, %163 : vector<2x32xf32>
    %165 = arith.negf %164 : vector<2x32xf32>
    %166 = math.exp %165 : vector<2x32xf32>
    %cst_41 = arith.constant 1.000000e+00 : f32
    %167 = vector.broadcast %cst_41 : f32 to vector<2x32xf32>
    %168 = arith.addf %167, %166 : vector<2x32xf32>
    %169 = arith.divf %167, %168 : vector<2x32xf32>
    %170 = vector.extract_strided_slice %149 {offsets = [0, 64], sizes = [2, 32], strides = [1, 1]} : vector<2x96xf32> to vector<2x32xf32>
    %171 = vector.extract_strided_slice %153 {offsets = [0, 64], sizes = [2, 32], strides = [1, 1]} : vector<2x96xf32> to vector<2x32xf32>
    %172 = arith.mulf %161, %171 : vector<2x32xf32>
    %173 = arith.addf %170, %172 : vector<2x32xf32>
    %174 = math.tanh %173 : vector<2x32xf32>
    %cst_42 = arith.constant 1.000000e+00 : f32
    %175 = vector.broadcast %cst_42 : f32 to vector<2x32xf32>
    %176 = arith.subf %175, %169 : vector<2x32xf32>
    %177 = arith.mulf %176, %174 : vector<2x32xf32>
    %178 = arith.mulf %169, %144 : vector<2x32xf32>
    %179 = arith.addf %177, %178 : vector<2x32xf32>
    %c5 = arith.constant 5 : index
    %c0_43 = arith.constant 0 : index
    %c0_44 = arith.constant 0 : index
    %180 = vector.load %arg1[%c5, %c0_43, %c0_44] : memref<8x2x16xbf16, #tpu.memory_space<vmem>>, vector<1x2x16xbf16>
    %181 = vector.shape_cast %180 : vector<1x2x16xbf16> to vector<2x16xbf16>
    %cst_45 = arith.constant dense<0.000000e+00> : vector<2x96xf32>
    %182 = tpu.matmul %181, %0, %cst_45 {dimension_numbers = #tpu.dot_dimension_numbers<[1], [0], [0], [1], [0, 0, 1, 1], [], []>} : vector<2x16xbf16>, vector<16x96xbf16>, vector<2x96xf32> -> vector<2x96xf32>
    %183 = vector.broadcast %2 : vector<1x96xf32> to vector<2x96xf32>
    %184 = arith.addf %182, %183 : vector<2x96xf32>
    %185 = arith.truncf %179 : vector<2x32xf32> to vector<2x32xbf16>
    %cst_46 = arith.constant dense<0.000000e+00> : vector<2x96xf32>
    %186 = tpu.matmul %185, %1, %cst_46 {dimension_numbers = #tpu.dot_dimension_numbers<[1], [0], [0], [1], [0, 0, 1, 1], [], []>} : vector<2x32xbf16>, vector<32x96xbf16>, vector<2x96xf32> -> vector<2x96xf32>
    %187 = vector.broadcast %3 : vector<1x96xf32> to vector<2x96xf32>
    %188 = arith.addf %186, %187 : vector<2x96xf32>
    %189 = vector.extract_strided_slice %184 {offsets = [0, 0], sizes = [2, 32], strides = [1, 1]} : vector<2x96xf32> to vector<2x32xf32>
    %190 = vector.extract_strided_slice %188 {offsets = [0, 0], sizes = [2, 32], strides = [1, 1]} : vector<2x96xf32> to vector<2x32xf32>
    %191 = arith.addf %189, %190 : vector<2x32xf32>
    %192 = arith.negf %191 : vector<2x32xf32>
    %193 = math.exp %192 : vector<2x32xf32>
    %cst_47 = arith.constant 1.000000e+00 : f32
    %194 = vector.broadcast %cst_47 : f32 to vector<2x32xf32>
    %195 = arith.addf %194, %193 : vector<2x32xf32>
    %196 = arith.divf %194, %195 : vector<2x32xf32>
    %197 = vector.extract_strided_slice %184 {offsets = [0, 32], sizes = [2, 32], strides = [1, 1]} : vector<2x96xf32> to vector<2x32xf32>
    %198 = vector.extract_strided_slice %188 {offsets = [0, 32], sizes = [2, 32], strides = [1, 1]} : vector<2x96xf32> to vector<2x32xf32>
    %199 = arith.addf %197, %198 : vector<2x32xf32>
    %200 = arith.negf %199 : vector<2x32xf32>
    %201 = math.exp %200 : vector<2x32xf32>
    %cst_48 = arith.constant 1.000000e+00 : f32
    %202 = vector.broadcast %cst_48 : f32 to vector<2x32xf32>
    %203 = arith.addf %202, %201 : vector<2x32xf32>
    %204 = arith.divf %202, %203 : vector<2x32xf32>
    %205 = vector.extract_strided_slice %184 {offsets = [0, 64], sizes = [2, 32], strides = [1, 1]} : vector<2x96xf32> to vector<2x32xf32>
    %206 = vector.extract_strided_slice %188 {offsets = [0, 64], sizes = [2, 32], strides = [1, 1]} : vector<2x96xf32> to vector<2x32xf32>
    %207 = arith.mulf %196, %206 : vector<2x32xf32>
    %208 = arith.addf %205, %207 : vector<2x32xf32>
    %209 = math.tanh %208 : vector<2x32xf32>
    %cst_49 = arith.constant 1.000000e+00 : f32
    %210 = vector.broadcast %cst_49 : f32 to vector<2x32xf32>
    %211 = arith.subf %210, %204 : vector<2x32xf32>
    %212 = arith.mulf %211, %209 : vector<2x32xf32>
    %213 = arith.mulf %204, %179 : vector<2x32xf32>
    %214 = arith.addf %212, %213 : vector<2x32xf32>
    %c6 = arith.constant 6 : index
    %c0_50 = arith.constant 0 : index
    %c0_51 = arith.constant 0 : index
    %215 = vector.load %arg1[%c6, %c0_50, %c0_51] : memref<8x2x16xbf16, #tpu.memory_space<vmem>>, vector<1x2x16xbf16>
    %216 = vector.shape_cast %215 : vector<1x2x16xbf16> to vector<2x16xbf16>
    %cst_52 = arith.constant dense<0.000000e+00> : vector<2x96xf32>
    %217 = tpu.matmul %216, %0, %cst_52 {dimension_numbers = #tpu.dot_dimension_numbers<[1], [0], [0], [1], [0, 0, 1, 1], [], []>} : vector<2x16xbf16>, vector<16x96xbf16>, vector<2x96xf32> -> vector<2x96xf32>
    %218 = vector.broadcast %2 : vector<1x96xf32> to vector<2x96xf32>
    %219 = arith.addf %217, %218 : vector<2x96xf32>
    %220 = arith.truncf %214 : vector<2x32xf32> to vector<2x32xbf16>
    %cst_53 = arith.constant dense<0.000000e+00> : vector<2x96xf32>
    %221 = tpu.matmul %220, %1, %cst_53 {dimension_numbers = #tpu.dot_dimension_numbers<[1], [0], [0], [1], [0, 0, 1, 1], [], []>} : vector<2x32xbf16>, vector<32x96xbf16>, vector<2x96xf32> -> vector<2x96xf32>
    %222 = vector.broadcast %3 : vector<1x96xf32> to vector<2x96xf32>
    %223 = arith.addf %221, %222 : vector<2x96xf32>
    %224 = vector.extract_strided_slice %219 {offsets = [0, 0], sizes = [2, 32], strides = [1, 1]} : vector<2x96xf32> to vector<2x32xf32>
    %225 = vector.extract_strided_slice %223 {offsets = [0, 0], sizes = [2, 32], strides = [1, 1]} : vector<2x96xf32> to vector<2x32xf32>
    %226 = arith.addf %224, %225 : vector<2x32xf32>
    %227 = arith.negf %226 : vector<2x32xf32>
    %228 = math.exp %227 : vector<2x32xf32>
    %cst_54 = arith.constant 1.000000e+00 : f32
    %229 = vector.broadcast %cst_54 : f32 to vector<2x32xf32>
    %230 = arith.addf %229, %228 : vector<2x32xf32>
    %231 = arith.divf %229, %230 : vector<2x32xf32>
    %232 = vector.extract_strided_slice %219 {offsets = [0, 32], sizes = [2, 32], strides = [1, 1]} : vector<2x96xf32> to vector<2x32xf32>
    %233 = vector.extract_strided_slice %223 {offsets = [0, 32], sizes = [2, 32], strides = [1, 1]} : vector<2x96xf32> to vector<2x32xf32>
    %234 = arith.addf %232, %233 : vector<2x32xf32>
    %235 = arith.negf %234 : vector<2x32xf32>
    %236 = math.exp %235 : vector<2x32xf32>
    %cst_55 = arith.constant 1.000000e+00 : f32
    %237 = vector.broadcast %cst_55 : f32 to vector<2x32xf32>
    %238 = arith.addf %237, %236 : vector<2x32xf32>
    %239 = arith.divf %237, %238 : vector<2x32xf32>
    %240 = vector.extract_strided_slice %219 {offsets = [0, 64], sizes = [2, 32], strides = [1, 1]} : vector<2x96xf32> to vector<2x32xf32>
    %241 = vector.extract_strided_slice %223 {offsets = [0, 64], sizes = [2, 32], strides = [1, 1]} : vector<2x96xf32> to vector<2x32xf32>
    %242 = arith.mulf %231, %241 : vector<2x32xf32>
    %243 = arith.addf %240, %242 : vector<2x32xf32>
    %244 = math.tanh %243 : vector<2x32xf32>
    %cst_56 = arith.constant 1.000000e+00 : f32
    %245 = vector.broadcast %cst_56 : f32 to vector<2x32xf32>
    %246 = arith.subf %245, %239 : vector<2x32xf32>
    %247 = arith.mulf %246, %244 : vector<2x32xf32>
    %248 = arith.mulf %239, %214 : vector<2x32xf32>
    %249 = arith.addf %247, %248 : vector<2x32xf32>
    %c7 = arith.constant 7 : index
    %c0_57 = arith.constant 0 : index
    %c0_58 = arith.constant 0 : index
    %250 = vector.load %arg1[%c7, %c0_57, %c0_58] : memref<8x2x16xbf16, #tpu.memory_space<vmem>>, vector<1x2x16xbf16>
    %251 = vector.shape_cast %250 : vector<1x2x16xbf16> to vector<2x16xbf16>
    %cst_59 = arith.constant dense<0.000000e+00> : vector<2x96xf32>
    %252 = tpu.matmul %251, %0, %cst_59 {dimension_numbers = #tpu.dot_dimension_numbers<[1], [0], [0], [1], [0, 0, 1, 1], [], []>} : vector<2x16xbf16>, vector<16x96xbf16>, vector<2x96xf32> -> vector<2x96xf32>
    %253 = vector.broadcast %2 : vector<1x96xf32> to vector<2x96xf32>
    %254 = arith.addf %252, %253 : vector<2x96xf32>
    %255 = arith.truncf %249 : vector<2x32xf32> to vector<2x32xbf16>
    %cst_60 = arith.constant dense<0.000000e+00> : vector<2x96xf32>
    %256 = tpu.matmul %255, %1, %cst_60 {dimension_numbers = #tpu.dot_dimension_numbers<[1], [0], [0], [1], [0, 0, 1, 1], [], []>} : vector<2x32xbf16>, vector<32x96xbf16>, vector<2x96xf32> -> vector<2x96xf32>
    %257 = vector.broadcast %3 : vector<1x96xf32> to vector<2x96xf32>
    %258 = arith.addf %256, %257 : vector<2x96xf32>
    %259 = vector.extract_strided_slice %254 {offsets = [0, 0], sizes = [2, 32], strides = [1, 1]} : vector<2x96xf32> to vector<2x32xf32>
    %260 = vector.extract_strided_slice %258 {offsets = [0, 0], sizes = [2, 32], strides = [1, 1]} : vector<2x96xf32> to vector<2x32xf32>
    %261 = arith.addf %259, %260 : vector<2x32xf32>
    %262 = arith.negf %261 : vector<2x32xf32>
    %263 = math.exp %262 : vector<2x32xf32>
    %cst_61 = arith.constant 1.000000e+00 : f32
    %264 = vector.broadcast %cst_61 : f32 to vector<2x32xf32>
    %265 = arith.addf %264, %263 : vector<2x32xf32>
    %266 = arith.divf %264, %265 : vector<2x32xf32>
    %267 = vector.extract_strided_slice %254 {offsets = [0, 32], sizes = [2, 32], strides = [1, 1]} : vector<2x96xf32> to vector<2x32xf32>
    %268 = vector.extract_strided_slice %258 {offsets = [0, 32], sizes = [2, 32], strides = [1, 1]} : vector<2x96xf32> to vector<2x32xf32>
    %269 = arith.addf %267, %268 : vector<2x32xf32>
    %270 = arith.negf %269 : vector<2x32xf32>
    %271 = math.exp %270 : vector<2x32xf32>
    %cst_62 = arith.constant 1.000000e+00 : f32
    %272 = vector.broadcast %cst_62 : f32 to vector<2x32xf32>
    %273 = arith.addf %272, %271 : vector<2x32xf32>
    %274 = arith.divf %272, %273 : vector<2x32xf32>
    %275 = vector.extract_strided_slice %254 {offsets = [0, 64], sizes = [2, 32], strides = [1, 1]} : vector<2x96xf32> to vector<2x32xf32>
    %276 = vector.extract_strided_slice %258 {offsets = [0, 64], sizes = [2, 32], strides = [1, 1]} : vector<2x96xf32> to vector<2x32xf32>
    %277 = arith.mulf %266, %276 : vector<2x32xf32>
    %278 = arith.addf %275, %277 : vector<2x32xf32>
    %279 = math.tanh %278 : vector<2x32xf32>
    %cst_63 = arith.constant 1.000000e+00 : f32
    %280 = vector.broadcast %cst_63 : f32 to vector<2x32xf32>
    %281 = arith.subf %280, %274 : vector<2x32xf32>
    %282 = arith.mulf %281, %279 : vector<2x32xf32>
    %283 = arith.mulf %274, %249 : vector<2x32xf32>
    %284 = arith.addf %282, %283 : vector<2x32xf32>
    %c0_64 = arith.constant 0 : index
    %c0_65 = arith.constant 0 : index
    %285 = vector.load %arg6[%c0_64, %c0_65] : memref<2x32xf32, #tpu.memory_space<vmem>>, vector<2x32xf32>
    tpu.vector_store %arg6[%c0_64, %c0_65], %284 {strides = array<i32>} : memref<2x32xf32, #tpu.memory_space<vmem>>, vector<2x32xf32>,
    return
  }
  func.func @transform_0(%arg0: i32) -> (i32, i32, i32) {
    %c0_i32 = arith.constant 0 : i32
    %c0_i32_0 = arith.constant 0 : i32
    %c0_i32_1 = arith.constant 0 : i32
    return %c0_i32, %arg0, %c0_i32_0 : i32, i32, i32
  }
  func.func @transform_1(%arg0: i32) -> (i32, i32) {
    %c0_i32 = arith.constant 0 : i32
    %c0_i32_0 = arith.constant 0 : i32
    %c0_i32_1 = arith.constant 0 : i32
    return %c0_i32, %c0_i32_0 : i32, i32
  }
  func.func @transform_2(%arg0: i32) -> (i32, i32) {
    %c0_i32 = arith.constant 0 : i32
    %c0_i32_0 = arith.constant 0 : i32
    %c0_i32_1 = arith.constant 0 : i32
    return %c0_i32, %c0_i32_0 : i32, i32
  }
  func.func @transform_3(%arg0: i32) -> (i32, i32) {
    %c0_i32 = arith.constant 0 : i32
    %c0_i32_0 = arith.constant 0 : i32
    %c0_i32_1 = arith.constant 0 : i32
    return %c0_i32, %c0_i32_0 : i32, i32
  }
  func.func @transform_4(%arg0: i32) -> (i32, i32) {
    %c0_i32 = arith.constant 0 : i32
    %c0_i32_0 = arith.constant 0 : i32
    %c0_i32_1 = arith.constant 0 : i32
    return %c0_i32, %c0_i32_0 : i32, i32
  }
  func.func @transform_5(%arg0: i32) -> (i32, i32) {
    %c0_i32 = arith.constant 0 : i32
    %c0_i32_0 = arith.constant 0 : i32
    return %arg0, %c0_i32 : i32, i32
  }
}

</mosaic_0001>

<llo_original>
// kernel: tpu_custom_call.1
$region0: #{tpu_custom_call.1}
  #allocation0 [shape = 'u32[]', space=smem, size = 0x4, offset = 0x4, fixed_abs, tag = 'smem constant byte address 0x4 - core index']
  #allocation1 [shape = 'u32[72,128]{1,0:T(1,128)}', space=vmem, size = 0x9000, scoped, tag = 'internal scratch']
  %s0 = inlined_call_operand.hbm [shape: bf16[8,2,16], index: 0, kind: input, shape index: {}]
  %s1 = inlined_call_operand.hbm [shape: bf16[16,96], index: 1, kind: input, shape index: {}]
  %s2 = inlined_call_operand.hbm [shape: bf16[32,96], index: 2, kind: input, shape index: {}]
  %s3 = inlined_call_operand.vmem [shape: f32[1,96], index: 3, kind: input, shape index: {}]
  %s4 = inlined_call_operand.vmem [shape: f32[1,96], index: 4, kind: input, shape index: {}]
  %s5 = inlined_call_operand.hbm [shape: f32[2,32], index: 5, kind: output, shape index: {}]
  %s6 = sld [smem:[#allocation0]]
  $region42: #{tpu_custom_call.1} parent=0
    _
  %s8 = ssub.s32 1, %s6
  %s9 = scalar_select 0, %s8, %s6
  $region1: #{tpu_custom_call.1} parent=0
    #allocation2 [shape = 'u8[4096]{0}', space=vmem, size = 0x1000, scoped, tag = 'input window, operand 0, single buffered']
    #allocation3 [shape = 's32[1]{0}', space=sflag, size = 0x4, scoped, tag = 'scoped memory for tpu_custom_call.1']
    #allocation4 [shape = 's32[1]{0}', space=sflag, size = 0x4, scoped, tag = 'scoped memory for tpu_custom_call.1']
    #allocation5 [shape = 'u8[4096]{0}', space=vmem, size = 0x1000, scoped, tag = 'input window, operand 1, single buffered']
    #allocation6 [shape = 's32[1]{0}', space=sflag, size = 0x4, scoped, tag = 'scoped memory for tpu_custom_call.1']
    #allocation7 [shape = 'u8[8192]{0}', space=vmem, size = 0x2000, scoped, tag = 'input window, operand 2, single buffered']
    #allocation8 [shape = 'u8[1024]{0}', space=vmem, size = 0x400, scoped, tag = 'output window, operand 0, single buffered']
    %10 = vsyncpa [#allocation3], 0
    %11 = vsyncpa [#allocation6], 0
    %12 = vsyncpa [#allocation4], 0
    // Predicated region
    $region2: #{tpu_custom_call.1} parent=1 // pred_check
      _
    $region3: #{tpu_custom_call.1} parent=1 // pred_check_branch
      %14 = sbr.rel (0) target = $region5
    $region4: #{tpu_custom_call.1} parent=1 // pred_region
      %16 = vsyncadd [#allocation3], 0
      %s17 = sshll.u32 %s0, 4
      %s18 = int_to_ptr.hbm [resolvable:$true] %s17
      %s19 = sshll.u32 [#allocation2], 4
      %s20 = int_to_ptr.vmem [resolvable:$true] %s19
      %25 = dma.hbm_to_vmem [thread:$0]  %s18, 128, %s20, [#allocation3], 16, 16, 1
    $region5: #{tpu_custom_call.1} parent=1 // pred_fallthru
      _
    // Predicated region
    $region6: #{tpu_custom_call.1} parent=1 // pred_check
      _
    $region7: #{tpu_custom_call.1} parent=1 // pred_check_branch
      %27 = sbr.rel (0) target = $region9
    $region8: #{tpu_custom_call.1} parent=1 // pred_region
      %29 = vsyncadd [#allocation6], 0
      %s30 = sshll.u32 %s1, 4
      %s31 = int_to_ptr.hbm [resolvable:$true] %s30
      %s32 = sshll.u32 [#allocation5], 4
      %s33 = int_to_ptr.vmem [resolvable:$true] %s32
      %38 = dma.hbm_to_vmem [thread:$0]  %s31, 128, %s33, [#allocation6], 64, 64, 4
    $region9: #{tpu_custom_call.1} parent=1 // pred_fallthru
      _
    // Predicated region
    $region10: #{tpu_custom_call.1} parent=1 // pred_check
      _
    $region11: #{tpu_custom_call.1} parent=1 // pred_check_branch
      %40 = sbr.rel (0) target = $region13
    $region12: #{tpu_custom_call.1} parent=1 // pred_region
      %42 = vsyncadd [#allocation6], 0
      %s43 = sshll.u32 %s2, 4
      %s44 = int_to_ptr.hbm [resolvable:$true] %s43
      %s45 = sshll.u32 [#allocation7], 4
      %s46 = int_to_ptr.vmem [resolvable:$true] %s45
      %51 = dma.hbm_to_vmem [thread:$0]  %s44, 256, %s46, [#allocation6], 64, 64, 4
    $region13: #{tpu_custom_call.1} parent=1 // pred_fallthru
      _
    // Predicated region
    $region14: #{tpu_custom_call.1} parent=1 // pred_check
      _
    $region15: #{tpu_custom_call.1} parent=1 // pred_check_branch
      %53 = sbr.rel (0) target = $region17
    $region16: #{tpu_custom_call.1} parent=1 // pred_region
      _
    $region17: #{tpu_custom_call.1} parent=1 // pred_fallthru
      _
    // Predicated region
    $region18: #{tpu_custom_call.1} parent=1 // pred_check
      _
    $region19: #{tpu_custom_call.1} parent=1 // pred_check_branch
      %55 = sbr.rel (0) target = $region21
    $region20: #{tpu_custom_call.1} parent=1 // pred_region
      _
    $region21: #{tpu_custom_call.1} parent=1 // pred_fallthru
      _
    // Predicated region
    $region22: #{tpu_custom_call.1} parent=1 // pred_check
      _
    $region23: #{tpu_custom_call.1} parent=1 // pred_check_branch
      %57 = sbr.rel (0) target = $region25
    $region24: #{tpu_custom_call.1} parent=1 // pred_region
      %59 = dma.done [#allocation3], 128
    $region25: #{tpu_custom_call.1} parent=1 // pred_fallthru
      _
    // Predicated region
    $region26: #{tpu_custom_call.1} parent=1 // pred_check
      _
    $region27: #{tpu_custom_call.1} parent=1 // pred_check_branch
      %61 = sbr.rel (0) target = $region29
    $region28: #{tpu_custom_call.1} parent=1 // pred_region
      %63 = dma.done [#allocation6], 128
    $region29: #{tpu_custom_call.1} parent=1 // pred_fallthru
      _
    // Predicated region
    $region30: #{tpu_custom_call.1} parent=1 // pred_check
      _
    $region31: #{tpu_custom_call.1} parent=1 // pred_check_branch
      %65 = sbr.rel (0) target = $region33
    $region32: #{tpu_custom_call.1} parent=1 // pred_region
      %67 = dma.done [#allocation6], 256
    $region33: #{tpu_custom_call.1} parent=1 // pred_fallthru
      _
    %v69 = vld [vmem:[#allocation5] sm:$0xf]
    %v70 = vld [vmem:[#allocation5 + $0x4] sm:$0xf]
    %v71 = vld [vmem:[#allocation7] sm:$0xf]
    %v72 = vld [vmem:[#allocation7 + $0x4] sm:$0xf]
    %v73 = vld [vmem:[#allocation7 + $0x8] sm:$0xf]
    %v74 = vld [vmem:[#allocation7 + $0xc] sm:$0xf]
    %v75 = vld [vmem:[%s3] sm:$0x1]
    %v76 = vld [vmem:[%s4] sm:$0x1]
    %v77 = vld [vmem:[#allocation2] sm:$0x1]
    %v79 = vperm.slane %v75, 0
    %v83 = vunpack.c.l.b16 %v69
    %v84 = vunpack.c.l.b16 %v70
    %v85 = vpack.c.b16 %v84, %v83
    %vm87 = vcmask 130048
    %v89 = vsel %vm87, %v77, 0
    %91 = vmatpush.bf16.msra.mxu0 0
    %92 = vmatpush.bf16.msra.mxu0 0
    %93 = vmatpush.bf16.msra.mxu0 0
    %94 = vmatpush.bf16.msra.mxu0 0
    %95 = vmatpush.bf16.msra.mxu0 0
    %96 = vmatpush.bf16.msra.mxu0 0
    %97 = vmatpush.bf16.msra.mxu0 0
    %98 = vmatpush.bf16.msra.mxu0 %v85
    %99 = vmatmul.bf16.gmra.mxu0 %v89
    %v100 = vpop.f32.mrf.mxu0
    %v101 = vadd.f32 %v79, %v100
    %v102 = vpop.f32.mrf.mxu0
    %103 = vdwg.mxu0
    %v105 = vperm.slane %v76, 0
    %v111 = vunpack.c.l.b16 %v71
    %v112 = vunpack.c.l.b16 %v72
    %v113 = vunpack.c.l.b16 %v73
    %v114 = vunpack.c.l.b16 %v74
    %v115 = vpack.c.b16 %v112, %v111
    %v116 = vpack.c.b16 %v114, %v113
    %vm119 = vcmask 261120
    %v121 = vsel %vm119, 0, 0
    %123 = vmatpush.bf16.msra.mxu0 0
    %124 = vmatpush.bf16.msra.mxu0 0
    %125 = vmatpush.bf16.msra.mxu0 0
    %126 = vmatpush.bf16.msra.mxu0 0
    %127 = vmatpush.bf16.msra.mxu0 0
    %128 = vmatpush.bf16.msra.mxu0 0
    %129 = vmatpush.bf16.msra.mxu0 %v116
    %130 = vmatpush.bf16.msra.mxu0 %v115
    %131 = vmatmul.bf16.gmra.mxu0 %v121
    %v132 = vpop.f32.mrf.mxu0
    %v133 = vadd.f32 %v105, %v132
    %v134 = vpop.f32.mrf.mxu0
    %135 = vdwg.mxu0
    %v136 = vadd.f32 %v101, %v133
    %v137 = vxor.u32 %v136, 2147483648
    %v138 = vmul.f32 %v137, 1.442695
    %v139 = vpow.pop %v138
    %v140 = vadd.f32 %v139, 1.0
    %v141 = vrcp.pop %v140
    %v142 = vmul.f32 %v140, %v141
    %v143 = vsub.f32 1.0, %v142
    %v144 = vmul.f32 %v141, %v143
    %v145 = vadd.f32 %v141, %v144
    %vm146 = vweird.f32 %v140
    %vm147 = vweird.f32 %v141
    %vm148 = vmor %vm146, %vm147
    %v149 = vsel %vm148, %v141, %v145
    %v150 = vand.u32 2147483647, %v140
    %vm151 = vcmp.eq.f32.partialorder %v150, 8.507059e+37
    %v152 = vand.u32 %v140, 2147483648
    %v153 = vor.u32 1.1754944e-38, %v152
    %v154 = vsel %vm151, %v153, %v149
    %v155 = vmul.f32 1.0, %v154
    %157 = vrot.lane.b32.xlu0 %v133, 64
    %v158 = vpop.permute.xlu0 %157
    %v160 = vmul.f32 %v155, %v158
    %162 = vrot.lane.b32.xlu0 %v160, 64
    %v163 = vpop.permute.xlu0 %162
    %v165 = vadd.f32 %v101, %v163
    %v166 = vtanh.pop %v165
    %v167 = vsub.f32 1.0, %v155
    %169 = vrot.lane.b32.xlu0 %v166, 96
    %v170 = vpop.permute.xlu0 %169
    %v172 = vmul.f32 %v167, %v170
    %v173 = vmul.f32 %v155, 0.0
    %v174 = vadd.f32 %v172, %v173
    %s175 = scalar_lea.vmem [#allocation2], 1
    %v176 = vld [vmem:[%s175] sm:$0x1]
    %v178 = vsel %vm87, %v176, 0
    %180 = vmatpush.bf16.msra.mxu0 0
    %181 = vmatpush.bf16.msra.mxu0 0
    %182 = vmatpush.bf16.msra.mxu0 0
    %183 = vmatpush.bf16.msra.mxu0 0
    %184 = vmatpush.bf16.msra.mxu0 0
    %185 = vmatpush.bf16.msra.mxu0 0
    %186 = vmatpush.bf16.msra.mxu0 0
    %187 = vmatpush.bf16.msra.mxu0 %v85
    %188 = vmatmul.bf16.gmra.mxu0 %v178
    %v189 = vpop.f32.mrf.mxu0
    %v190 = vadd.f32 %v79, %v189
    %v191 = vpop.f32.mrf.mxu0
    %192 = vdwg.mxu0
    %v193 = vpack.c.bf16 %v174, %v174
    %195 = vrot.lane.b32.xlu0 %v193, 96
    %v196 = vpop.permute.xlu0 %195
    %v198 = vsel %vm119, %v196, 0
    %200 = vmatpush.bf16.msra.mxu0 0
    %201 = vmatpush.bf16.msra.mxu0 0
    %202 = vmatpush.bf16.msra.mxu0 0
    %203 = vmatpush.bf16.msra.mxu0 0
    %204 = vmatpush.bf16.msra.mxu0 0
    %205 = vmatpush.bf16.msra.mxu0 0
    %206 = vmatpush.bf16.msra.mxu0 %v116
    %207 = vmatpush.bf16.msra.mxu0 %v115
    %208 = vmatmul.bf16.gmra.mxu0 %v198
    %v209 = vpop.f32.mrf.mxu0
    %v210 = vadd.f32 %v105, %v209
    %v211 = vpop.f32.mrf.mxu0
    %212 = vdwg.mxu0
    %v213 = vadd.f32 %v190, %v210
    %v214 = vxor.u32 %v213, 2147483648
    %v215 = vmul.f32 %v214, 1.442695
    %v216 = vpow.pop %v215
    %v217 = vadd.f32 %v216, 1.0
    %v218 = vrcp.pop %v217
    %v219 = vmul.f32 %v217, %v218
    %v220 = vsub.f32 1.0, %v219
    %v221 = vmul.f32 %v218, %v220
    %v222 = vadd.f32 %v218, %v221
    %vm223 = vweird.f32 %v217
    %vm224 = vweird.f32 %v218
    %vm225 = vmor %vm223, %vm224
    %v226 = vsel %vm225, %v218, %v222
    %v227 = vand.u32 2147483647, %v217
    %vm228 = vcmp.eq.f32.partialorder %v227, 8.507059e+37
    %v229 = vand.u32 %v217, 2147483648
    %v230 = vor.u32 1.1754944e-38, %v229
    %v231 = vsel %vm228, %v230, %v226
    %v232 = vmul.f32 1.0, %v231
    %234 = vrot.lane.b32.xlu0 %v210, 64
    %v235 = vpop.permute.xlu0 %234
    %v237 = vmul.f32 %v232, %v235
    %239 = vrot.lane.b32.xlu0 %v237, 64
    %v240 = vpop.permute.xlu0 %239
    %v242 = vadd.f32 %v190, %v240
    %v243 = vtanh.pop %v242
    %v244 = vsub.f32 1.0, %v232
    %246 = vrot.lane.b32.xlu0 %v243, 96
    %v247 = vpop.permute.xlu0 %246
    %v249 = vmul.f32 %v244, %v247
    %v250 = vmul.f32 %v232, %v174
    %v251 = vadd.f32 %v249, %v250
    %s252 = scalar_lea.vmem [#allocation2], 2
    %v253 = vld [vmem:[%s252] sm:$0x1]
    %v255 = vsel %vm87, %v253, 0
    %257 = vmatpush.bf16.msra.mxu0 0
    %258 = vmatpush.bf16.msra.mxu0 0
    %259 = vmatpush.bf16.msra.mxu0 0
    %260 = vmatpush.bf16.msra.mxu0 0
    %261 = vmatpush.bf16.msra.mxu0 0
    %262 = vmatpush.bf16.msra.mxu0 0
    %263 = vmatpush.bf16.msra.mxu0 0
    %264 = vmatpush.bf16.msra.mxu0 %v85
    %265 = vmatmul.bf16.gmra.mxu0 %v255
    %v266 = vpop.f32.mrf.mxu0
    %v267 = vadd.f32 %v79, %v266
    %v268 = vpop.f32.mrf.mxu0
    %269 = vdwg.mxu0
    %v270 = vpack.c.bf16 %v251, %v251
    %272 = vrot.lane.b32.xlu0 %v270, 96
    %v273 = vpop.permute.xlu0 %272
    %v275 = vsel %vm119, %v273, 0
    %277 = vmatpush.bf16.msra.mxu0 0
    %278 = vmatpush.bf16.msra.mxu0 0
    %279 = vmatpush.bf16.msra.mxu0 0
    %280 = vmatpush.bf16.msra.mxu0 0
    %281 = vmatpush.bf16.msra.mxu0 0
    %282 = vmatpush.bf16.msra.mxu0 0
    %283 = vmatpush.bf16.msra.mxu0 %v116
    %284 = vmatpush.bf16.msra.mxu0 %v115
    %285 = vmatmul.bf16.gmra.mxu0 %v275
    %v286 = vpop.f32.mrf.mxu0
    %v287 = vadd.f32 %v105, %v286
    %v288 = vpop.f32.mrf.mxu0
    %289 = vdwg.mxu0
    %v290 = vadd.f32 %v267, %v287
    %v291 = vxor.u32 %v290, 2147483648
    %v292 = vmul.f32 %v291, 1.442695
    %v293 = vpow.pop %v292
    %v294 = vadd.f32 %v293, 1.0
    %v295 = vrcp.pop %v294
    %v296 = vmul.f32 %v294, %v295
    %v297 = vsub.f32 1.0, %v296
    %v298 = vmul.f32 %v295, %v297
    %v299 = vadd.f32 %v295, %v298
    %vm300 = vweird.f32 %v294
    %vm301 = vweird.f32 %v295
    %vm302 = vmor %vm300, %vm301
    %v303 = vsel %vm302, %v295, %v299
    %v304 = vand.u32 2147483647, %v294
    %vm305 = vcmp.eq.f32.partialorder %v304, 8.507059e+37
    %v306 = vand.u32 %v294, 2147483648
    %v307 = vor.u32 1.1754944e-38, %v306
    %v308 = vsel %vm305, %v307, %v303
    %v309 = vmul.f32 1.0, %v308
    %311 = vrot.lane.b32.xlu0 %v287, 64
    %v312 = vpop.permute.xlu0 %311
    %v314 = vmul.f32 %v309, %v312
    %316 = vrot.lane.b32.xlu0 %v314, 64
    %v317 = vpop.permute.xlu0 %316
    %v319 = vadd.f32 %v267, %v317
    %v320 = vtanh.pop %v319
    %v321 = vsub.f32 1.0, %v309
    %323 = vrot.lane.b32.xlu0 %v320, 96
    %v324 = vpop.permute.xlu0 %323
    %v326 = vmul.f32 %v321, %v324
    %v327 = vmul.f32 %v309, %v251
    %v328 = vadd.f32 %v326, %v327
    %s329 = scalar_lea.vmem [#allocation2], 3
    %v330 = vld [vmem:[%s329] sm:$0x1]
    %v332 = vsel %vm87, %v330, 0
    %334 = vmatpush.bf16.msra.mxu0 0
    %335 = vmatpush.bf16.msra.mxu0 0
    %336 = vmatpush.bf16.msra.mxu0 0
    %337 = vmatpush.bf16.msra.mxu0 0
    %338 = vmatpush.bf16.msra.mxu0 0
    %339 = vmatpush.bf16.msra.mxu0 0
    %340 = vmatpush.bf16.msra.mxu0 0
    %341 = vmatpush.bf16.msra.mxu0 %v85
    %342 = vmatmul.bf16.gmra.mxu0 %v332
    %v343 = vpop.f32.mrf.mxu0
    %v344 = vadd.f32 %v79, %v343
    %v345 = vpop.f32.mrf.mxu0
    %346 = vdwg.mxu0
    %v347 = vpack.c.bf16 %v328, %v328
    %349 = vrot.lane.b32.xlu0 %v347, 96
    %v350 = vpop.permute.xlu0 %349
    %v352 = vsel %vm119, %v350, 0
    %354 = vmatpush.bf16.msra.mxu0 0
    %355 = vmatpush.bf16.msra.mxu0 0
    %356 = vmatpush.bf16.msra.mxu0 0
    %357 = vmatpush.bf16.msra.mxu0 0
    %358 = vmatpush.bf16.msra.mxu0 0
    %359 = vmatpush.bf16.msra.mxu0 0
    %360 = vmatpush.bf16.msra.mxu0 %v116
    %361 = vmatpush.bf16.msra.mxu0 %v115
    %362 = vmatmul.bf16.gmra.mxu0 %v352
    %v363 = vpop.f32.mrf.mxu0
    %v364 = vadd.f32 %v105, %v363
    %v365 = vpop.f32.mrf.mxu0
    %366 = vdwg.mxu0
    %v367 = vadd.f32 %v344, %v364
    %v368 = vxor.u32 %v367, 2147483648
    %v369 = vmul.f32 %v368, 1.442695
    %v370 = vpow.pop %v369
    %v371 = vadd.f32 %v370, 1.0
    %v372 = vrcp.pop %v371
    %v373 = vmul.f32 %v371, %v372
    %v374 = vsub.f32 1.0, %v373
    %v375 = vmul.f32 %v372, %v374
    %v376 = vadd.f32 %v372, %v375
    %vm377 = vweird.f32 %v371
    %vm378 = vweird.f32 %v372
    %vm379 = vmor %vm377, %vm378
    %v380 = vsel %vm379, %v372, %v376
    %v381 = vand.u32 2147483647, %v371
    %vm382 = vcmp.eq.f32.partialorder %v381, 8.507059e+37
    %v383 = vand.u32 %v371, 2147483648
    %v384 = vor.u32 1.1754944e-38, %v383
    %v385 = vsel %vm382, %v384, %v380
    %v386 = vmul.f32 1.0, %v385
    %388 = vrot.lane.b32.xlu0 %v364, 64
    %v389 = vpop.permute.xlu0 %388
    %v391 = vmul.f32 %v386, %v389
    %393 = vrot.lane.b32.xlu0 %v391, 64
    %v394 = vpop.permute.xlu0 %393
    %v396 = vadd.f32 %v344, %v394
    %v397 = vtanh.pop %v396
    %v398 = vsub.f32 1.0, %v386
    %400 = vrot.lane.b32.xlu0 %v397, 96
    %v401 = vpop.permute.xlu0 %400
    %v403 = vmul.f32 %v398, %v401
    %v404 = vmul.f32 %v386, %v328
    %v405 = vadd.f32 %v403, %v404
    %s406 = scalar_lea.vmem [#allocation2], 4
    %v407 = vld [vmem:[%s406] sm:$0x1]
    %v409 = vsel %vm87, %v407, 0
    %411 = vmatpush.bf16.msra.mxu0 0
    %412 = vmatpush.bf16.msra.mxu0 0
    %413 = vmatpush.bf16.msra.mxu0 0
    %414 = vmatpush.bf16.msra.mxu0 0
    %415 = vmatpush.bf16.msra.mxu0 0
    %416 = vmatpush.bf16.msra.mxu0 0
    %417 = vmatpush.bf16.msra.mxu0 0
    %418 = vmatpush.bf16.msra.mxu0 %v85
    %419 = vmatmul.bf16.gmra.mxu0 %v409
    %v420 = vpop.f32.mrf.mxu0
    %v421 = vadd.f32 %v79, %v420
    %v422 = vpop.f32.mrf.mxu0
    %423 = vdwg.mxu0
    %v424 = vpack.c.bf16 %v405, %v405
    %426 = vrot.lane.b32.xlu0 %v424, 96
    %v427 = vpop.permute.xlu0 %426
    %v429 = vsel %vm119, %v427, 0
    %431 = vmatpush.bf16.msra.mxu0 0
    %432 = vmatpush.bf16.msra.mxu0 0
    %433 = vmatpush.bf16.msra.mxu0 0
    %434 = vmatpush.bf16.msra.mxu0 0
    %435 = vmatpush.bf16.msra.mxu0 0
    %436 = vmatpush.bf16.msra.mxu0 0
    %437 = vmatpush.bf16.msra.mxu0 %v116
    %438 = vmatpush.bf16.msra.mxu0 %v115
    %439 = vmatmul.bf16.gmra.mxu0 %v429
    %v440 = vpop.f32.mrf.mxu0
    %v441 = vadd.f32 %v105, %v440
    %v442 = vpop.f32.mrf.mxu0
    %443 = vdwg.mxu0
    %v444 = vadd.f32 %v421, %v441
    %v445 = vxor.u32 %v444, 2147483648
    %v446 = vmul.f32 %v445, 1.442695
    %v447 = vpow.pop %v446
    %v448 = vadd.f32 %v447, 1.0
    %v449 = vrcp.pop %v448
    %v450 = vmul.f32 %v448, %v449
    %v451 = vsub.f32 1.0, %v450
    %v452 = vmul.f32 %v449, %v451
    %v453 = vadd.f32 %v449, %v452
    %vm454 = vweird.f32 %v448
    %vm455 = vweird.f32 %v449
    %vm456 = vmor %vm454, %vm455
    %v457 = vsel %vm456, %v449, %v453
    %v458 = vand.u32 2147483647, %v448
    %vm459 = vcmp.eq.f32.partialorder %v458, 8.507059e+37
    %v460 = vand.u32 %v448, 2147483648
    %v461 = vor.u32 1.1754944e-38, %v460
    %v462 = vsel %vm459, %v461, %v457
    %v463 = vmul.f32 1.0, %v462
    %465 = vrot.lane.b32.xlu0 %v441, 64
    %v466 = vpop.permute.xlu0 %465
    %v468 = vmul.f32 %v463, %v466
    %470 = vrot.lane.b32.xlu0 %v468, 64
    %v471 = vpop.permute.xlu0 %470
    %v473 = vadd.f32 %v421, %v471
    %v474 = vtanh.pop %v473
    %v475 = vsub.f32 1.0, %v463
    %477 = vrot.lane.b32.xlu0 %v474, 96
    %v478 = vpop.permute.xlu0 %477
    %v480 = vmul.f32 %v475, %v478
    %v481 = vmul.f32 %v463, %v405
    %v482 = vadd.f32 %v480, %v481
    %s483 = scalar_lea.vmem [#allocation2], 5
    %v484 = vld [vmem:[%s483] sm:$0x1]
    %v486 = vsel %vm87, %v484, 0
    %488 = vmatpush.bf16.msra.mxu0 0
    %489 = vmatpush.bf16.msra.mxu0 0
    %490 = vmatpush.bf16.msra.mxu0 0
    %491 = vmatpush.bf16.msra.mxu0 0
    %492 = vmatpush.bf16.msra.mxu0 0
    %493 = vmatpush.bf16.msra.mxu0 0
    %494 = vmatpush.bf16.msra.mxu0 0
    %495 = vmatpush.bf16.msra.mxu0 %v85
    %496 = vmatmul.bf16.gmra.mxu0 %v486
    %v497 = vpop.f32.mrf.mxu0
    %v498 = vadd.f32 %v79, %v497
    %v499 = vpop.f32.mrf.mxu0
    %500 = vdwg.mxu0
    %v501 = vpack.c.bf16 %v482, %v482
    %503 = vrot.lane.b32.xlu0 %v501, 96
    %v504 = vpop.permute.xlu0 %503
    %v506 = vsel %vm119, %v504, 0
    %508 = vmatpush.bf16.msra.mxu0 0
    %509 = vmatpush.bf16.msra.mxu0 0
    %510 = vmatpush.bf16.msra.mxu0 0
    %511 = vmatpush.bf16.msra.mxu0 0
    %512 = vmatpush.bf16.msra.mxu0 0
    %513 = vmatpush.bf16.msra.mxu0 0
    %514 = vmatpush.bf16.msra.mxu0 %v116
    %515 = vmatpush.bf16.msra.mxu0 %v115
    %516 = vmatmul.bf16.gmra.mxu0 %v506
    %v517 = vpop.f32.mrf.mxu0
    %v518 = vadd.f32 %v105, %v517
    %v519 = vpop.f32.mrf.mxu0
    %520 = vdwg.mxu0
    %v521 = vadd.f32 %v498, %v518
    %v522 = vxor.u32 %v521, 2147483648
    %v523 = vmul.f32 %v522, 1.442695
    %v524 = vpow.pop %v523
    %v525 = vadd.f32 %v524, 1.0
    %v526 = vrcp.pop %v525
    %v527 = vmul.f32 %v525, %v526
    %v528 = vsub.f32 1.0, %v527
    %v529 = vmul.f32 %v526, %v528
    %v530 = vadd.f32 %v526, %v529
    %vm531 = vweird.f32 %v525
    %vm532 = vweird.f32 %v526
    %vm533 = vmor %vm531, %vm532
    %v534 = vsel %vm533, %v526, %v530
    %v535 = vand.u32 2147483647, %v525
    %vm536 = vcmp.eq.f32.partialorder %v535, 8.507059e+37
    %v537 = vand.u32 %v525, 2147483648
    %v538 = vor.u32 1.1754944e-38, %v537
    %v539 = vsel %vm536, %v538, %v534
    %v540 = vmul.f32 1.0, %v539
    %542 = vrot.lane.b32.xlu0 %v518, 64
    %v543 = vpop.permute.xlu0 %542
    %v545 = vmul.f32 %v540, %v543
    %547 = vrot.lane.b32.xlu0 %v545, 64
    %v548 = vpop.permute.xlu0 %547
    %v550 = vadd.f32 %v498, %v548
    %v551 = vtanh.pop %v550
    %v552 = vsub.f32 1.0, %v540
    %554 = vrot.lane.b32.xlu0 %v551, 96
    %v555 = vpop.permute.xlu0 %554
    %v557 = vmul.f32 %v552, %v555
    %v558 = vmul.f32 %v540, %v482
    %v559 = vadd.f32 %v557, %v558
    %s560 = scalar_lea.vmem [#allocation2], 6
    %v561 = vld [vmem:[%s560] sm:$0x1]
    %v563 = vsel %vm87, %v561, 0
    %565 = vmatpush.bf16.msra.mxu0 0
    %566 = vmatpush.bf16.msra.mxu0 0
    %567 = vmatpush.bf16.msra.mxu0 0
    %568 = vmatpush.bf16.msra.mxu0 0
    %569 = vmatpush.bf16.msra.mxu0 0
    %570 = vmatpush.bf16.msra.mxu0 0
    %571 = vmatpush.bf16.msra.mxu0 0
    %572 = vmatpush.bf16.msra.mxu0 %v85
    %573 = vmatmul.bf16.gmra.mxu0 %v563
    %v574 = vpop.f32.mrf.mxu0
    %v575 = vadd.f32 %v79, %v574
    %v576 = vpop.f32.mrf.mxu0
    %577 = vdwg.mxu0
    %v578 = vpack.c.bf16 %v559, %v559
    %580 = vrot.lane.b32.xlu0 %v578, 96
    %v581 = vpop.permute.xlu0 %580
    %v583 = vsel %vm119, %v581, 0
    %585 = vmatpush.bf16.msra.mxu0 0
    %586 = vmatpush.bf16.msra.mxu0 0
    %587 = vmatpush.bf16.msra.mxu0 0
    %588 = vmatpush.bf16.msra.mxu0 0
    %589 = vmatpush.bf16.msra.mxu0 0
    %590 = vmatpush.bf16.msra.mxu0 0
    %591 = vmatpush.bf16.msra.mxu0 %v116
    %592 = vmatpush.bf16.msra.mxu0 %v115
    %593 = vmatmul.bf16.gmra.mxu0 %v583
    %v594 = vpop.f32.mrf.mxu0
    %v595 = vadd.f32 %v105, %v594
    %v596 = vpop.f32.mrf.mxu0
    %597 = vdwg.mxu0
    %v598 = vadd.f32 %v575, %v595
    %v599 = vxor.u32 %v598, 2147483648
    %v600 = vmul.f32 %v599, 1.442695
    %v601 = vpow.pop %v600
    %v602 = vadd.f32 %v601, 1.0
    %v603 = vrcp.pop %v602
    %v604 = vmul.f32 %v602, %v603
    %v605 = vsub.f32 1.0, %v604
    %v606 = vmul.f32 %v603, %v605
    %v607 = vadd.f32 %v603, %v606
    %vm608 = vweird.f32 %v602
    %vm609 = vweird.f32 %v603
    %vm610 = vmor %vm608, %vm609
    %v611 = vsel %vm610, %v603, %v607
    %v612 = vand.u32 2147483647, %v602
    %vm613 = vcmp.eq.f32.partialorder %v612, 8.507059e+37
    %v614 = vand.u32 %v602, 2147483648
    %v615 = vor.u32 1.1754944e-38, %v614
    %v616 = vsel %vm613, %v615, %v611
    %v617 = vmul.f32 1.0, %v616
    %619 = vrot.lane.b32.xlu0 %v595, 64
    %v620 = vpop.permute.xlu0 %619
    %v622 = vmul.f32 %v617, %v620
    %624 = vrot.lane.b32.xlu0 %v622, 64
    %v625 = vpop.permute.xlu0 %624
    %v627 = vadd.f32 %v575, %v625
    %v628 = vtanh.pop %v627
    %v629 = vsub.f32 1.0, %v617
    %631 = vrot.lane.b32.xlu0 %v628, 96
    %v632 = vpop.permute.xlu0 %631
    %v634 = vmul.f32 %v629, %v632
    %v635 = vmul.f32 %v617, %v559
    %v636 = vadd.f32 %v634, %v635
    %s637 = scalar_lea.vmem [#allocation2], 7
    %v638 = vld [vmem:[%s637] sm:$0x1]
    %v640 = vsel %vm87, %v638, 0
    %642 = vmatpush.bf16.msra.mxu0 0
    %643 = vmatpush.bf16.msra.mxu0 0
    %644 = vmatpush.bf16.msra.mxu0 0
    %645 = vmatpush.bf16.msra.mxu0 0
    %646 = vmatpush.bf16.msra.mxu0 0
    %647 = vmatpush.bf16.msra.mxu0 0
    %648 = vmatpush.bf16.msra.mxu0 0
    %649 = vmatpush.bf16.msra.mxu0 %v85
    %650 = vmatmul.bf16.gmra.mxu0 %v640
    %v651 = vpop.f32.mrf.mxu0
    %v652 = vadd.f32 %v79, %v651
    %v653 = vpop.f32.mrf.mxu0
    %654 = vdwg.mxu0
    %v655 = vpack.c.bf16 %v636, %v636
    %657 = vrot.lane.b32.xlu0 %v655, 96
    %v658 = vpop.permute.xlu0 %657
    %v660 = vsel %vm119, %v658, 0
    %662 = vmatpush.bf16.msra.mxu0 0
    %663 = vmatpush.bf16.msra.mxu0 0
    %664 = vmatpush.bf16.msra.mxu0 0
    %665 = vmatpush.bf16.msra.mxu0 0
    %666 = vmatpush.bf16.msra.mxu0 0
    %667 = vmatpush.bf16.msra.mxu0 0
    %668 = vmatpush.bf16.msra.mxu0 %v116
    %669 = vmatpush.bf16.msra.mxu0 %v115
    %670 = vmatmul.bf16.gmra.mxu0 %v660
    %v671 = vpop.f32.mrf.mxu0
    %v672 = vadd.f32 %v105, %v671
    %v673 = vpop.f32.mrf.mxu0
    %674 = vdwg.mxu0
    %v675 = vadd.f32 %v652, %v672
    %v676 = vxor.u32 %v675, 2147483648
    %v677 = vmul.f32 %v676, 1.442695
    %v678 = vpow.pop %v677
    %v679 = vadd.f32 %v678, 1.0
    %v680 = vrcp.pop %v679
    %v681 = vmul.f32 %v679, %v680
    %v682 = vsub.f32 1.0, %v681
    %v683 = vmul.f32 %v680, %v682
    %v684 = vadd.f32 %v680, %v683
    %vm685 = vweird.f32 %v679
    %vm686 = vweird.f32 %v680
    %vm687 = vmor %vm685, %vm686
    %v688 = vsel %vm687, %v680, %v684
    %v689 = vand.u32 2147483647, %v679
    %vm690 = vcmp.eq.f32.partialorder %v689, 8.507059e+37
    %v691 = vand.u32 %v679, 2147483648
    %v692 = vor.u32 1.1754944e-38, %v691
    %v693 = vsel %vm690, %v692, %v688
    %v694 = vmul.f32 1.0, %v693
    %696 = vrot.lane.b32.xlu0 %v672, 64
    %v697 = vpop.permute.xlu0 %696
    %v699 = vmul.f32 %v694, %v697
    %701 = vrot.lane.b32.xlu0 %v699, 64
    %v702 = vpop.permute.xlu0 %701
    %v704 = vadd.f32 %v652, %v702
    %v705 = vtanh.pop %v704
    %v706 = vsub.f32 1.0, %v694
    %708 = vrot.lane.b32.xlu0 %v705, 96
    %v709 = vpop.permute.xlu0 %708
    %v711 = vmul.f32 %v706, %v709
    %v712 = vmul.f32 %v694, %v636
    %v713 = vadd.f32 %v711, %v712
    %715 = vrot.lane.b32.xlu0 %v713, 96
    %v716 = vpop.permute.xlu0 %715
    %vm718 = vcmask 254976
    %719 = vst.msk [vmem:[#allocation8] sm:$0x3] %vm718, %v716
    // Predicated region
    $region34: #{tpu_custom_call.1} parent=1 // pred_check
      _
    $region35: #{tpu_custom_call.1} parent=1 // pred_check_branch
      %721 = sbr.rel (0) target = $region37
    $region36: #{tpu_custom_call.1} parent=1 // pred_region
      %723 = vsyncadd [#allocation4], 0
      %s725 = sshll.u32 [#allocation8], 4
      %s726 = int_to_ptr.vmem [resolvable:$true] %s725
      %s727 = sshll.u32 %s5, 4
      %s728 = int_to_ptr.hbm [resolvable:$true] %s727
      %730 = dma.vmem_to_hbm [thread:$0]  %s726, 32, %s728, [#allocation4]
    $region37: #{tpu_custom_call.1} parent=1 // pred_fallthru
      _
    // Predicated region
    $region38: #{tpu_custom_call.1} parent=1 // pred_check
      _
    $region39: #{tpu_custom_call.1} parent=1 // pred_check_branch
      %732 = sbr.rel (0) target = $region41
    $region40: #{tpu_custom_call.1} parent=1 // pred_region
      %734 = dma.done [#allocation4], 32
    $region41: #{tpu_custom_call.1} parent=1 // pred_fallthru
      _
    %735 = vsyncpa [#allocation3], 1
    %736 = vsyncpa [#allocation6], 1
    %737 = vsyncpa [#allocation4], 1

</llo_original>
